<compile_context>
chip_gen: v6e
topology: v6e:2x2x1
jax: 0.10.0
libtpu: 0.0.40
codegen_flags: <defaults>
</compile_context>

<pallas_src>
import functools

import jax
import jax.numpy as jnp
from jax.experimental import pallas as pl
from jax.experimental.pallas import tpu as pltpu


def mlp_kernel(x_ref, w1_ref, b1_ref, w2_ref, b2_ref, o_ref):
    # hidden = relu(x @ W1 + b1) -- MXU matmul with f32 accumulation.
    h = jnp.dot(x_ref[...], w1_ref[...], preferred_element_type=jnp.float32)
    h = h + b1_ref[...].astype(jnp.float32)        # (1, H) broadcasts over rows
    h = jnp.maximum(h, 0.0)                        # ReLU (VPU, f32 epilogue)
    # out = hidden @ W2 + b2
    out = jnp.dot(h.astype(w2_ref.dtype), w2_ref[...],
                  preferred_element_type=jnp.float32)
    out = out + b2_ref[...].astype(jnp.float32)
    o_ref[...] = out.astype(o_ref.dtype)


def _round_up(x: int, m: int) -> int:
    return ((x + m - 1) // m) * m


def _pick_tile_b(batch: int, in_p: int, hid_p: int, out_p: int, itemsize: int,
                 requested: int = 256,
                 vmem_budget_bytes: int = 32 * 1024 * 1024) -> int:
    """Largest sublane-aligned batch tile whose working set fits the VMEM budget."""
    sublane = 8 if itemsize >= 4 else (16 if itemsize == 2 else 32)
    # Weights + biases (assume Pallas may double-buffer them too -> 2x, conservative).
    resident = 2 * (in_p * hid_p + hid_p * out_p + hid_p + out_p) * itemsize
    # Per batch row: double-buffered x & out tiles + f32 hidden/out temporaries.
    per_row = 2 * (in_p + out_p) * itemsize + (hid_p + out_p) * 4
    avail = max(vmem_budget_bytes - resident, per_row * sublane)
    tile = min(requested, avail // per_row)
    tile = max(sublane, (tile // sublane) * sublane)
    batch_p = _round_up(batch, sublane)
    return min(tile, batch_p)


@functools.partial(jax.jit, static_argnames=("tile_b",))
def mlp_forward(x, w1, b1, w2, b2, *, tile_b: int = 256):
    """x: (B, input_dim) -> (B, output_dim) computing relu(x@W1+b1)@W2+b2."""
    B, in_dim = x.shape
    hid = w1.shape[1]
    out_dim = w2.shape[1]
    b1 = b1.reshape(1, hid)
    b2 = b2.reshape(1, out_dim)

    LANE = 128
    in_p = _round_up(in_dim, LANE)
    hid_p = _round_up(hid, LANE)
    out_p = _round_up(out_dim, LANE)
    itemsize = jnp.dtype(x.dtype).itemsize

    tb = _pick_tile_b(B, in_p, hid_p, out_p, itemsize, requested=tile_b)
    B_p = _round_up(B, tb)

    # Zero-pad to hardware-friendly shapes; zero pads keep the math exact
    # (padded K rows contribute 0, padded hidden cols stay 0 through ReLU since
    # their bias pad is 0, so they add nothing into the second matmul).
    def pad2(a, r, c):
        pr, pc = r - a.shape[0], c - a.shape[1]
        return a if (pr == 0 and pc == 0) else jnp.pad(a, ((0, pr), (0, pc)))

    x_p = pad2(x, B_p, in_p)
    w1_p = pad2(w1, in_p, hid_p)
    b1_p = pad2(b1, 1, hid_p)
    w2_p = pad2(w2, hid_p, out_p)
    b2_p = pad2(b2, 1, out_p)

    grid = (B_p // tb,)
    flops = 2 * B_p * (in_p * hid_p + hid_p * out_p)
    bytes_accessed = (x_p.size + w1_p.size + b1_p.size + w2_p.size + b2_p.size
                      + B_p * out_p) * itemsize

    out_padded = pl.pallas_call(
        mlp_kernel,
        out_shape=jax.ShapeDtypeStruct((B_p, out_p), x.dtype),
        grid=grid,
        in_specs=[
            pl.BlockSpec((tb, in_p), lambda i: (i, 0)),       # x streams over batch
            pl.BlockSpec((in_p, hid_p), lambda i: (0, 0)),    # W1 resident
            pl.BlockSpec((1, hid_p), lambda i: (0, 0)),       # b1 resident
            pl.BlockSpec((hid_p, out_p), lambda i: (0, 0)),   # W2 resident
            pl.BlockSpec((1, out_p), lambda i: (0, 0)),       # b2 resident
        ],
        out_specs=pl.BlockSpec((tb, out_p), lambda i: (i, 0)),
        compiler_params=pltpu.CompilerParams(
            dimension_semantics=("parallel",)),               # batch tiles across TCs
        cost_estimate=pl.CostEstimate(flops=flops, transcendentals=0,
                                      bytes_accessed=bytes_accessed),
    )(x_p, w1_p, b1_p, w2_p, b2_p)

    return out_padded[:B, :out_dim]


def init_mlp_params(key, input_dim, output_dim, hidden_dim=128, dtype=jnp.float32):
    """Deterministic init mimicking PyTorch nn.Linear (uniform +/- 1/sqrt(fan_in))."""
    k1, k2, k3, k4 = jax.random.split(key, 4)
    bound1 = 1.0 / (input_dim ** 0.5)
    bound2 = 1.0 / (hidden_dim ** 0.5)
    w1 = jax.random.uniform(k1, (input_dim, hidden_dim), dtype, -bound1, bound1)
    b1 = jax.random.uniform(k2, (hidden_dim,), dtype, -bound1, bound1)
    w2 = jax.random.uniform(k3, (hidden_dim, output_dim), dtype, -bound2, bound2)
    b2 = jax.random.uniform(k4, (output_dim,), dtype, -bound2, bound2)
    return w1, b1, w2, b2


def _reference(x, w1, b1, w2, b2):
    return jnp.maximum(x @ w1 + b1, 0.0) @ w2 + b2


if __name__ == "__main__":
    key = jax.random.PRNGKey(0)

    # --- Small shapes matching the module spec (batch=2, in=32, hidden=128, out=16).
    batch, input_dim, output_dim, hidden_dim = 2, 32, 16, 128
    kx, kp, kx2, kp2 = jax.random.split(key, 4)
    x = jax.random.normal(kx, (batch, input_dim), dtype=jnp.float32)
    w1, b1, w2, b2 = init_mlp_params(kp, input_dim, output_dim, hidden_dim)

    out = mlp_forward(x, w1, b1, w2, b2)
    jax.block_until_ready(out)
    ref = _reference(x, w1, b1, w2, b2)
    assert out.shape == (batch, output_dim)
    assert jnp.allclose(out, ref, atol=1e-5, rtol=1e-5)

    # --- Second check exercising padding + a multi-tile batch grid.
    B2, in2, out2, hid2 = 300, 72, 200, 128
    x2 = jax.random.normal(kx2, (B2, in2), dtype=jnp.float32)
    p2 = init_mlp_params(kp2, in2, out2, hid2)
    out2_arr = mlp_forward(x2, *p2, tile_b=128)
    jax.block_until_ready(out2_arr)
    ref2 = _reference(x2, *p2)
    assert out2_arr.shape == (B2, out2)
    assert jnp.allclose(out2_arr, ref2, atol=1e-4, rtol=1e-4)

    # --- bf16 fast path (v6e/v7x MXU), f32 accumulation inside the kernel.
    xb = x2.astype(jnp.bfloat16)
    pb = tuple(p.astype(jnp.bfloat16) for p in p2)
    out_bf16 = mlp_forward(xb, *pb)
    jax.block_until_ready(out_bf16)
    assert out_bf16.shape == (B2, out2)
    assert jnp.allclose(out_bf16.astype(jnp.float32), ref2, atol=5e-1, rtol=5e-2)

    print("KERNEL_OK")
</pallas_src>

<mosaic_0001>
module attributes {stable_mosaic.version = 11 : i64} {
  func.func @mlp_kernel(%arg0: i32, %arg1: memref<8x128xf32, #tpu.memory_space<vmem>>, %arg2: memref<128x128xf32, #tpu.memory_space<vmem>>, %arg3: memref<1x128xf32, #tpu.memory_space<vmem>>, %arg4: memref<128x128xf32, #tpu.memory_space<vmem>>, %arg5: memref<1x128xf32, #tpu.memory_space<vmem>>, %arg6: memref<8x128xf32, #tpu.memory_space<vmem>>) attributes {dimension_semantics = [#tpu.dimension_semantics<parallel>], iteration_bounds = array<i64: 1>, scalar_prefetch = 0 : i64, scratch_operands = 0 : i64, tpu.core_type = #tpu.core_type<tc>, window_params = [{transform_indices = @transform_0, window_bounds = array<i64: 8, 128>}, {pipeline_mode = #tpu.pipeline_mode<synchronous>, transform_indices = @transform_1, window_bounds = array<i64: 128, 128>}, {pipeline_mode = #tpu.pipeline_mode<synchronous>, transform_indices = @transform_2, window_bounds = array<i64: 1, 128>}, {pipeline_mode = #tpu.pipeline_mode<synchronous>, transform_indices = @transform_3, window_bounds = array<i64: 128, 128>}, {pipeline_mode = #tpu.pipeline_mode<synchronous>, transform_indices = @transform_4, window_bounds = array<i64: 1, 128>}, {transform_indices = @transform_5, window_bounds = array<i64: 8, 128>}]} {
    %c0 = arith.constant 0 : index
    %c0_0 = arith.constant 0 : index
    %0 = vector.load %arg1[%c0, %c0_0] : memref<8x128xf32, #tpu.memory_space<vmem>>, vector<8x128xf32>
    %c0_1 = arith.constant 0 : index
    %c0_2 = arith.constant 0 : index
    %1 = vector.load %arg2[%c0_1, %c0_2] : memref<128x128xf32, #tpu.memory_space<vmem>>, vector<128x128xf32>
    %cst = arith.constant dense<0.000000e+00> : vector<8x128xf32>
    %2 = tpu.matmul %0, %1, %cst {dimension_numbers = #tpu.dot_dimension_numbers<[1], [0], [0], [1], [0, 0, 1, 1], [], []>} : vector<8x128xf32>, vector<128x128xf32>, vector<8x128xf32> -> vector<8x128xf32>
    %c0_3 = arith.constant 0 : index
    %c0_4 = arith.constant 0 : index
    %3 = vector.load %arg3[%c0_3, %c0_4] : memref<1x128xf32, #tpu.memory_space<vmem>>, vector<1x128xf32>
    %4 = vector.broadcast %3 : vector<1x128xf32> to vector<8x128xf32>
    %5 = arith.addf %2, %4 : vector<8x128xf32>
    %cst_5 = arith.constant 0.000000e+00 : f32
    %6 = vector.broadcast %cst_5 : f32 to vector<8x128xf32>
    %7 = arith.maximumf %5, %6 : vector<8x128xf32>
    %c0_6 = arith.constant 0 : index
    %c0_7 = arith.constant 0 : index
    %8 = vector.load %arg4[%c0_6, %c0_7] : memref<128x128xf32, #tpu.memory_space<vmem>>, vector<128x128xf32>
    %cst_8 = arith.constant dense<0.000000e+00> : vector<8x128xf32>
    %9 = tpu.matmul %7, %8, %cst_8 {dimension_numbers = #tpu.dot_dimension_numbers<[1], [0], [0], [1], [0, 0, 1, 1], [], []>} : vector<8x128xf32>, vector<128x128xf32>, vector<8x128xf32> -> vector<8x128xf32>
    %c0_9 = arith.constant 0 : index
    %c0_10 = arith.constant 0 : index
    %10 = vector.load %arg5[%c0_9, %c0_10] : memref<1x128xf32, #tpu.memory_space<vmem>>, vector<1x128xf32>
    %11 = vector.broadcast %10 : vector<1x128xf32> to vector<8x128xf32>
    %12 = arith.addf %9, %11 : vector<8x128xf32>
    %c0_11 = arith.constant 0 : index
    %c0_12 = arith.constant 0 : index
    %13 = vector.load %arg6[%c0_11, %c0_12] : memref<8x128xf32, #tpu.memory_space<vmem>>, vector<8x128xf32>
    tpu.vector_store %arg6[%c0_11, %c0_12], %12 {strides = array<i32>} : memref<8x128xf32, #tpu.memory_space<vmem>>, vector<8x128xf32>,
    return
  }
  func.func @transform_0(%arg0: i32) -> (i32, i32) {
    %c0_i32 = arith.constant 0 : i32
    %c0_i32_0 = arith.constant 0 : i32
    return %arg0, %c0_i32 : i32, i32
  }
  func.func @transform_1(%arg0: i32) -> (i32, i32) {
    %c0_i32 = arith.constant 0 : i32
    %c0_i32_0 = arith.constant 0 : i32
    %c0_i32_1 = arith.constant 0 : i32
    return %c0_i32, %c0_i32_0 : i32, i32
  }
  func.func @transform_2(%arg0: i32) -> (i32, i32) {
    %c0_i32 = arith.constant 0 : i32
    %c0_i32_0 = arith.constant 0 : i32
    %c0_i32_1 = arith.constant 0 : i32
    return %c0_i32, %c0_i32_0 : i32, i32
  }
  func.func @transform_3(%arg0: i32) -> (i32, i32) {
    %c0_i32 = arith.constant 0 : i32
    %c0_i32_0 = arith.constant 0 : i32
    %c0_i32_1 = arith.constant 0 : i32
    return %c0_i32, %c0_i32_0 : i32, i32
  }
  func.func @transform_4(%arg0: i32) -> (i32, i32) {
    %c0_i32 = arith.constant 0 : i32
    %c0_i32_0 = arith.constant 0 : i32
    %c0_i32_1 = arith.constant 0 : i32
    return %c0_i32, %c0_i32_0 : i32, i32
  }
  func.func @transform_5(%arg0: i32) -> (i32, i32) {
    %c0_i32 = arith.constant 0 : i32
    %c0_i32_0 = arith.constant 0 : i32
    return %arg0, %c0_i32 : i32, i32
  }
}

</mosaic_0001>

<llo_original>
// kernel: mlp_forward.1
$region0: #{mlp_forward.1}
  #allocation0 [shape = 'u32[]', space=smem, size = 0x4, offset = 0x4, fixed_abs, tag = 'smem constant byte address 0x4 - core index']
  #allocation1 [shape = 'u32[144,128]{1,0:T(1,128)}', space=vmem, size = 0x12000, scoped, tag = 'internal scratch']
  %s0 = inlined_call_operand.vmem [shape: f32[8,128], index: 0, kind: input, shape index: {}]
  %s1 = inlined_call_operand.vmem [shape: f32[128,128], index: 1, kind: input, shape index: {}]
  %s2 = inlined_call_operand.vmem [shape: f32[1,128], index: 2, kind: input, shape index: {}]
  %s3 = inlined_call_operand.vmem [shape: f32[128,128], index: 3, kind: input, shape index: {}]
  %s4 = inlined_call_operand.vmem [shape: f32[1,128], index: 4, kind: input, shape index: {}]
  %s5 = inlined_call_operand.vmem [shape: f32[8,128], index: 5, kind: output, shape index: {}]
  %s6 = sld [smem:[#allocation0]]
  $region30: #{mlp_forward.1} parent=0
    _
  %s8 = ssub.s32 1, %s6
  %s9 = scalar_select 0, %s8, %s6
  // Predicated region
  $region2: #{mlp_forward.1} parent=0 // pred_check
    _
  $region3: #{mlp_forward.1} parent=0 // pred_check_branch
    %11 = sbr.rel (0) target = $region5
  $region4: #{mlp_forward.1} parent=0 // pred_region
    _
  $region5: #{mlp_forward.1} parent=0 // pred_fallthru
    _
  // Predicated region
  $region6: #{mlp_forward.1} parent=0 // pred_check
    _
  $region7: #{mlp_forward.1} parent=0 // pred_check_branch
    %13 = sbr.rel (0) target = $region9
  $region8: #{mlp_forward.1} parent=0 // pred_region
    _
  $region9: #{mlp_forward.1} parent=0 // pred_fallthru
    _
  // Predicated region
  $region10: #{mlp_forward.1} parent=0 // pred_check
    _
  $region11: #{mlp_forward.1} parent=0 // pred_check_branch
    %15 = sbr.rel (0) target = $region13
  $region12: #{mlp_forward.1} parent=0 // pred_region
    _
  $region13: #{mlp_forward.1} parent=0 // pred_fallthru
    _
  // Predicated region
  $region14: #{mlp_forward.1} parent=0 // pred_check
    _
  $region15: #{mlp_forward.1} parent=0 // pred_check_branch
    %17 = sbr.rel (0) target = $region17
  $region16: #{mlp_forward.1} parent=0 // pred_region
    _
  $region17: #{mlp_forward.1} parent=0 // pred_fallthru
    _
  // Predicated region
  $region18: #{mlp_forward.1} parent=0 // pred_check
    _
  $region19: #{mlp_forward.1} parent=0 // pred_check_branch
    %19 = sbr.rel (0) target = $region21
  $region20: #{mlp_forward.1} parent=0 // pred_region
    _
  $region21: #{mlp_forward.1} parent=0 // pred_fallthru
    _
  %v20 = vld [vmem:[%s0] sm:$0xff]
  %v21 = vld [vmem:[%s1] sm:$0xff]
  %v22 = vld [vmem:[%s1 + $0x8] sm:$0xff]
  %v23 = vld [vmem:[%s1 + $0x10] sm:$0xff]
  %v24 = vld [vmem:[%s1 + $0x18] sm:$0xff]
  %v25 = vld [vmem:[%s1 + $0x20] sm:$0xff]
  %v26 = vld [vmem:[%s1 + $0x28] sm:$0xff]
  %v27 = vld [vmem:[%s1 + $0x30] sm:$0xff]
  %v28 = vld [vmem:[%s1 + $0x38] sm:$0xff]
  %v29 = vld [vmem:[%s1 + $0x40] sm:$0xff]
  %v30 = vld [vmem:[%s1 + $0x48] sm:$0xff]
  %v31 = vld [vmem:[%s1 + $0x50] sm:$0xff]
  %v32 = vld [vmem:[%s1 + $0x58] sm:$0xff]
  %v33 = vld [vmem:[%s1 + $0x60] sm:$0xff]
  %v34 = vld [vmem:[%s1 + $0x68] sm:$0xff]
  %v35 = vld [vmem:[%s1 + $0x70] sm:$0xff]
  %v36 = vld [vmem:[%s1 + $0x78] sm:$0xff]
  %v37 = vld [vmem:[%s2] sm:$0x1]
  %v39 = vlaneseq
  %v40 = vshrl.u32 %v39, 7
  %v41 = vsub.s32 0, %v40
  %v42 = vrot.slane %v37, %v41
  %44 = vmatprep.subr.mxu0 0.0
  %45 = vmatpush1.msra.mxu0 %v36
  %46 = vmatprep.subr.mxu0 0.0
  %47 = vmatpush1.msra.mxu0 %v35
  %48 = vmatprep.subr.mxu0 0.0
  %49 = vmatpush1.msra.mxu0 %v34
  %50 = vmatprep.subr.mxu0 0.0
  %51 = vmatpush1.msra.mxu0 %v33
  %52 = vmatprep.subr.mxu0 0.0
  %53 = vmatpush1.msra.mxu0 %v32
  %54 = vmatprep.subr.mxu0 0.0
  %55 = vmatpush1.msra.mxu0 %v31
  %56 = vmatprep.subr.mxu0 0.0
  %57 = vmatpush1.msra.mxu0 %v30
  %58 = vmatprep.subr.mxu0 0.0
  %59 = vmatpush1.msra.mxu0 %v29
  %60 = vmatprep.subr.mxu0 0.0
  %61 = vmatpush1.msra.mxu0 %v28
  %62 = vmatprep.subr.mxu0 0.0
  %63 = vmatpush1.msra.mxu0 %v27
  %64 = vmatprep.subr.mxu0 0.0
  %65 = vmatpush1.msra.mxu0 %v26
  %66 = vmatprep.subr.mxu0 0.0
  %67 = vmatpush1.msra.mxu0 %v25
  %68 = vmatprep.subr.mxu0 0.0
  %69 = vmatpush1.msra.mxu0 %v24
  %70 = vmatprep.subr.mxu0 0.0
  %71 = vmatpush1.msra.mxu0 %v23
  %72 = vmatprep.subr.mxu0 0.0
  %73 = vmatpush1.msra.mxu0 %v22
  %74 = vmatprep.subr.mxu0 0.0
  %75 = vmatpush1.msra.mxu0 %v21
  %76 = vmatprep.subr.mxu0 0.0
  %77 = vmatpush2.msra.mxu0 0.0
  %78 = vmatprep.subr.mxu0 0.0
  %79 = vmatpush2.msra.mxu0 0.0
  %80 = vmatprep.subr.mxu0 0.0
  %81 = vmatpush2.msra.mxu0 0.0
  %82 = vmatprep.subr.mxu0 0.0
  %83 = vmatpush2.msra.mxu0 0.0
  %84 = vmatprep.subr.mxu0 0.0
  %85 = vmatpush2.msra.mxu0 0.0
  %86 = vmatprep.subr.mxu0 0.0
  %87 = vmatpush2.msra.mxu0 0.0
  %88 = vmatprep.subr.mxu0 0.0
  %89 = vmatpush2.msra.mxu0 0.0
  %90 = vmatprep.subr.mxu0 0.0
  %91 = vmatpush2.msra.mxu0 0.0
  %92 = vmatprep.subr.mxu0 0.0
  %93 = vmatpush2.msra.mxu0 0.0
  %94 = vmatprep.subr.mxu0 0.0
  %95 = vmatpush2.msra.mxu0 0.0
  %96 = vmatprep.subr.mxu0 0.0
  %97 = vmatpush2.msra.mxu0 0.0
  %98 = vmatprep.subr.mxu0 0.0
  %99 = vmatpush2.msra.mxu0 0.0
  %100 = vmatprep.subr.mxu0 0.0
  %101 = vmatpush2.msra.mxu0 0.0
  %102 = vmatprep.subr.mxu0 0.0
  %103 = vmatpush2.msra.mxu0 0.0
  %104 = vmatprep.subr.mxu0 0.0
  %105 = vmatpush2.msra.mxu0 0.0
  %106 = vmatprep.subr.mxu0 0.0
  %107 = vmatpush2.msra.mxu0 0.0
  %108 = vmatprep.mubr.f32.mxu0 0.0
  %109 = vmatmul.mubr.f32.gmra.mxu0 %v20
  %v110 = vpop.f32.mrf.mxu0
  %v111 = vadd.f32 %v42, %v110
  %v112 = vpop.f32.mrf.mxu0
  %113 = vdwg.mxu0
  %v114 = vmax.f32 %v111, 0.0
  %v115 = vld [vmem:[%s3] sm:$0xff]
  %v116 = vld [vmem:[%s3 + $0x8] sm:$0xff]
  %v117 = vld [vmem:[%s3 + $0x10] sm:$0xff]
  %v118 = vld [vmem:[%s3 + $0x18] sm:$0xff]
  %v119 = vld [vmem:[%s3 + $0x20] sm:$0xff]
  %v120 = vld [vmem:[%s3 + $0x28] sm:$0xff]
  %v121 = vld [vmem:[%s3 + $0x30] sm:$0xff]
  %v122 = vld [vmem:[%s3 + $0x38] sm:$0xff]
  %v123 = vld [vmem:[%s3 + $0x40] sm:$0xff]
  %v124 = vld [vmem:[%s3 + $0x48] sm:$0xff]
  %v125 = vld [vmem:[%s3 + $0x50] sm:$0xff]
  %v126 = vld [vmem:[%s3 + $0x58] sm:$0xff]
  %v127 = vld [vmem:[%s3 + $0x60] sm:$0xff]
  %v128 = vld [vmem:[%s3 + $0x68] sm:$0xff]
  %v129 = vld [vmem:[%s3 + $0x70] sm:$0xff]
  %v130 = vld [vmem:[%s3 + $0x78] sm:$0xff]
  %v131 = vld [vmem:[%s4] sm:$0x1]
  %v133 = vlaneseq
  %v134 = vshrl.u32 %v133, 7
  %v135 = vsub.s32 0, %v134
  %v136 = vrot.slane %v131, %v135
  %138 = vmatprep.subr.mxu0 0.0
  %139 = vmatpush1.msra.mxu0 %v130
  %140 = vmatprep.subr.mxu0 0.0
  %141 = vmatpush1.msra.mxu0 %v129
  %142 = vmatprep.subr.mxu0 0.0
  %143 = vmatpush1.msra.mxu0 %v128
  %144 = vmatprep.subr.mxu0 0.0
  %145 = vmatpush1.msra.mxu0 %v127
  %146 = vmatprep.subr.mxu0 0.0
  %147 = vmatpush1.msra.mxu0 %v126
  %148 = vmatprep.subr.mxu0 0.0
  %149 = vmatpush1.msra.mxu0 %v125
  %150 = vmatprep.subr.mxu0 0.0
  %151 = vmatpush1.msra.mxu0 %v124
  %152 = vmatprep.subr.mxu0 0.0
  %153 = vmatpush1.msra.mxu0 %v123
  %154 = vmatprep.subr.mxu0 0.0
  %155 = vmatpush1.msra.mxu0 %v122
  %156 = vmatprep.subr.mxu0 0.0
  %157 = vmatpush1.msra.mxu0 %v121
  %158 = vmatprep.subr.mxu0 0.0
  %159 = vmatpush1.msra.mxu0 %v120
  %160 = vmatprep.subr.mxu0 0.0
  %161 = vmatpush1.msra.mxu0 %v119
  %162 = vmatprep.subr.mxu0 0.0
  %163 = vmatpush1.msra.mxu0 %v118
  %164 = vmatprep.subr.mxu0 0.0
  %165 = vmatpush1.msra.mxu0 %v117
  %166 = vmatprep.subr.mxu0 0.0
  %167 = vmatpush1.msra.mxu0 %v116
  %168 = vmatprep.subr.mxu0 0.0
  %169 = vmatpush1.msra.mxu0 %v115
  %170 = vmatprep.subr.mxu0 0.0
  %171 = vmatpush2.msra.mxu0 0.0
  %172 = vmatprep.subr.mxu0 0.0
  %173 = vmatpush2.msra.mxu0 0.0
  %174 = vmatprep.subr.mxu0 0.0
  %175 = vmatpush2.msra.mxu0 0.0
  %176 = vmatprep.subr.mxu0 0.0
  %177 = vmatpush2.msra.mxu0 0.0
  %178 = vmatprep.subr.mxu0 0.0
  %179 = vmatpush2.msra.mxu0 0.0
  %180 = vmatprep.subr.mxu0 0.0
  %181 = vmatpush2.msra.mxu0 0.0
  %182 = vmatprep.subr.mxu0 0.0
  %183 = vmatpush2.msra.mxu0 0.0
  %184 = vmatprep.subr.mxu0 0.0
  %185 = vmatpush2.msra.mxu0 0.0
  %186 = vmatprep.subr.mxu0 0.0
  %187 = vmatpush2.msra.mxu0 0.0
  %188 = vmatprep.subr.mxu0 0.0
  %189 = vmatpush2.msra.mxu0 0.0
  %190 = vmatprep.subr.mxu0 0.0
  %191 = vmatpush2.msra.mxu0 0.0
  %192 = vmatprep.subr.mxu0 0.0
  %193 = vmatpush2.msra.mxu0 0.0
  %194 = vmatprep.subr.mxu0 0.0
  %195 = vmatpush2.msra.mxu0 0.0
  %196 = vmatprep.subr.mxu0 0.0
  %197 = vmatpush2.msra.mxu0 0.0
  %198 = vmatprep.subr.mxu0 0.0
  %199 = vmatpush2.msra.mxu0 0.0
  %200 = vmatprep.subr.mxu0 0.0
  %201 = vmatpush2.msra.mxu0 0.0
  %202 = vmatprep.mubr.f32.mxu0 0.0
  %203 = vmatmul.mubr.f32.gmra.mxu0 %v114
  %v204 = vpop.f32.mrf.mxu0
  %v205 = vadd.f32 %v136, %v204
  %v206 = vpop.f32.mrf.mxu0
  %207 = vdwg.mxu0
  %208 = vst [vmem:[%s5] sm:$0xff] %v205
  // Predicated region
  $region22: #{mlp_forward.1} parent=0 // pred_check
    _
  $region23: #{mlp_forward.1} parent=0 // pred_check_branch
    %210 = sbr.rel (0) target = $region25
  $region24: #{mlp_forward.1} parent=0 // pred_region
    _
  $region25: #{mlp_forward.1} parent=0 // pred_fallthru
    _
  // Predicated region
  $region26: #{mlp_forward.1} parent=0 // pred_check
    _
  $region27: #{mlp_forward.1} parent=0 // pred_check_branch
    %212 = sbr.rel (0) target = $region29
  $region28: #{mlp_forward.1} parent=0 // pred_region
    _
  $region29: #{mlp_forward.1} parent=0 // pred_fallthru
    _

</llo_original>
